<compile_context>
chip_gen: v7x
topology: tpu7x:2x2x1
jax: 0.10.0
libtpu: 0.0.40
codegen_flags: <defaults>
</compile_context>

<pallas_src>
import functools
import math

import jax
import jax.numpy as jnp
from jax.experimental import pallas as pl
from jax.experimental.pallas import tpu as pltpu


def _sdpa_kernel(q_ref, k_ref, v_ref, mask_ref, ctx_ref, attn_ref, *, inv_sqrt_dk):
    # One (BH-block, q-tile) slice per grid step.
    # Scale Q in f32 (accuracy), then cast operands to bf16 for the MXU.
    q = (q_ref[...] * inv_sqrt_dk).astype(jnp.bfloat16)   # (TB, TQ, Dk)
    k = k_ref[...].astype(jnp.bfloat16)                   # (TB, Lk, Dk)
    v = v_ref[...].astype(jnp.bfloat16)                   # (TB, Lk, Dv)

    # scores = (Q / sqrt(dk)) @ K^T : contract last dims directly (no K transpose),
    # bf16 operands on the MXU, f32 accumulation.
    scores = jnp.einsum("bqd,bkd->bqk", q, k,
                        preferred_element_type=jnp.float32)        # (TB, TQ, Lk) f32

    # masked_fill_(attn_mask, -1e9) — exact PyTorch semantics (fully-masked rows
    # become uniform after softmax). Mask is int8 {0,1}.
    scores = jnp.where(mask_ref[...] != 0, jnp.float32(-1000000000.0), scores)

    # Numerically-stable softmax along the last axis (f32 elementwise math).
    scores = scores - jnp.max(scores, axis=-1, keepdims=True)
    e = jnp.exp(scores)                                                   # EUP
    inv_denom = pl.reciprocal(jnp.sum(e, axis=-1, keepdims=True), approx=True)

    attn = e * inv_denom
    attn_ref[...] = attn.astype(attn_ref.dtype)

    # context = attn @ V, reusing the normalized attn (it is materialized anyway).
    ctx = jnp.einsum("bqk,bkd->bqd", attn.astype(jnp.bfloat16), v,
                     preferred_element_type=jnp.float32)
    ctx_ref[...] = ctx.astype(ctx_ref.dtype)


def _step_footprint_bytes(tb, tq, lk, dk, dv):
    """Rough per-grid-step VMEM footprint for the auto-pipelined kernel."""
    # Double-buffered input tiles: f32 Q/K/V + int8 mask.
    in_bytes = tb * (tq * dk * 4 + lk * dk * 4 + lk * dv * 4 + tq * lk * 1)
    # Double-buffered f32 output tiles (ctx + attn).
    out_bytes = tb * (tq * dv * 4 + tq * lk * 4)
    # Live intermediates: ~3 f32 (TQ,Lk) arrays + bf16 casts of q/k/v + f32 ctx.
    inter = tb * (3 * tq * lk * 4 + tq * dk * 2 + lk * (dk + dv) * 2 + tq * dv * 4)
    return 2 * (in_bytes + out_bytes) + inter


def _vmem_budget_bytes():
    try:
        cap = int(pltpu.get_tpu_info().vmem_capacity_bytes)
    except Exception:
        cap = 64 * 1024 * 1024  # conservative fallback (v7x per-core VMEM)
    # Leave headroom for compiler-internal scratch; never request physical VMEM.
    return (cap * 3) // 4


def _choose_tiles(bh, lq, lk, dk, dv, vmem_budget):
    """Pick (TB heads-per-step, TQ q-tile) whose footprint fits the VMEM budget."""
    tq_cands = [t for t in (512, 256, 128) if lq % t == 0]
    if not tq_cands:
        tq_cands = [lq]
    tq = tq_cands[-1]  # smallest candidate as fallback
    for t in tq_cands:  # largest first
        if _step_footprint_bytes(1, t, lk, dk, dv) <= vmem_budget:
            tq = t
            break
    # Amortize per-step overhead when a head fits in one q-tile: block several heads.
    tb = 1
    if tq == lq:
        for cand in (16, 8, 4, 2):
            if bh % cand == 0 and _step_footprint_bytes(cand, tq, lk, dk, dv) <= vmem_budget:
                tb = cand
                break
    return tb, tq


def scaled_dot_product_attention(Q, K, V, attn_mask):
    """Q:(B,H,Lq,Dk)  K:(B,H,Lk,Dk)  V:(B,H,Lk,Dv)  attn_mask:(B,H,Lq,Lk) bool (True==masked)."""
    B, H, Lq, Dk = Q.shape
    Lk = K.shape[2]
    Dv = V.shape[3]
    BH = B * H
    out_dtype = jnp.float32

    # Keep Q/K/V in f32 in HBM (no standalone cast pass); cast to bf16 in-kernel.
    q = Q.reshape(BH, Lq, Dk).astype(jnp.float32)
    k = K.reshape(BH, Lk, Dk).astype(jnp.float32)
    v = V.reshape(BH, Lk, Dv).astype(jnp.float32)
    mask = attn_mask.reshape(BH, Lq, Lk).astype(jnp.int8)   # {0, 1}

    inv_sqrt_dk = 1.0 / math.sqrt(float(Dk))

    budget = _vmem_budget_bytes()
    tb, tq = _choose_tiles(BH, Lq, Lk, Dk, Dv, budget)
    nq = Lq // tq
    nbh = BH // tb

    kernel = functools.partial(_sdpa_kernel, inv_sqrt_dk=inv_sqrt_dk)

    fp = _step_footprint_bytes(tb, tq, Lk, Dk, Dv)
    vmem_limit = int(min(budget, max(32 * 1024 * 1024, 2 * fp)))

    flops = 2 * BH * Lq * Lk * (Dk + Dv)
    bytes_accessed = (
        BH * (Lq * Dk + Lk * Dk + Lk * Dv) * 4   # f32 Q/K/V reads
        + BH * Lq * Lk * 1                       # int8 mask read
        + BH * Lq * Dv * 4 + BH * Lq * Lk * 4    # f32 ctx + attn writes
    )
    cost = pl.CostEstimate(
        flops=flops, transcendentals=BH * Lq * Lk, bytes_accessed=bytes_accessed
    )

    ctx, attn = pl.pallas_call(
        kernel,
        out_shape=(
            jax.ShapeDtypeStruct((BH, Lq, Dv), out_dtype),
            jax.ShapeDtypeStruct((BH, Lq, Lk), out_dtype),
        ),
        grid_spec=pltpu.PrefetchScalarGridSpec(
            num_scalar_prefetch=0,
            grid=(nbh, nq),
            in_specs=[
                pl.BlockSpec((tb, tq, Dk), lambda i, j: (i, j, 0)),
                pl.BlockSpec((tb, Lk, Dk), lambda i, j: (i, 0, 0)),   # resident across j
                pl.BlockSpec((tb, Lk, Dv), lambda i, j: (i, 0, 0)),   # resident across j
                pl.BlockSpec((tb, tq, Lk), lambda i, j: (i, j, 0)),
            ],
            out_specs=[
                pl.BlockSpec((tb, tq, Dv), lambda i, j: (i, j, 0)),
                pl.BlockSpec((tb, tq, Lk), lambda i, j: (i, j, 0)),
            ],
        ),
        compiler_params=pltpu.CompilerParams(
            # BH axis parallel (megacore shards whole heads); q-tile axis arbitrary so
            # one core's K/V residency is never split across the j sweep.
            dimension_semantics=("parallel", "arbitrary"),
            vmem_limit_bytes=vmem_limit,
        ),
        cost_estimate=cost,
    )(q, k, v, mask)

    context = ctx.reshape(B, H, Lq, Dv)
    attn = attn.reshape(B, H, Lq, Lk)
    return context, attn


def _reference(Q, K, V, attn_mask):
    Dk = Q.shape[-1]
    scores = jnp.matmul(Q, jnp.swapaxes(K, -1, -2)) / jnp.sqrt(jnp.float32(Dk))
    scores = jnp.where(attn_mask, -1000000000.0, scores)
    attn = jax.nn.softmax(scores, axis=-1)
    context = jnp.matmul(attn, V)
    return context, attn


if __name__ == "__main__":
    key = jax.random.PRNGKey(0)
    kq, kk, kv, km = jax.random.split(key, 4)

    B, H, Lq, Lk, Dk, Dv = 2, 4, 8, 8, 32, 32
    Q = jax.random.normal(kq, (B, H, Lq, Dk), dtype=jnp.float32)
    K = jax.random.normal(kk, (B, H, Lk, Dk), dtype=jnp.float32)
    V = jax.random.normal(kv, (B, H, Lk, Dv), dtype=jnp.float32)
    # boolean mask: True == position masked out (e.g. padding)
    attn_mask = jax.random.bernoulli(km, 0.2, (B, H, Lq, Lk))

    context, attn = scaled_dot_product_attention(Q, K, V, attn_mask)
    jax.block_until_ready((context, attn))

    ref_ctx, ref_attn = _reference(Q, K, V, attn_mask)
    assert context.shape == (B, H, Lq, Dv) and attn.shape == (B, H, Lq, Lk)
    # bf16 matmul operands + approx reciprocal -> loosen tolerance vs. f32 reference.
    assert jnp.allclose(context, ref_ctx, atol=3e-2, rtol=3e-2)
    assert jnp.allclose(attn, ref_attn, atol=2e-2, rtol=2e-2)

    print("KERNEL_OK")
</pallas_src>

<mosaic_0001>
module attributes {stable_mosaic.version = 11 : i64} {
  func.func @_sdpa_kernel(%arg0: i32, %arg1: i32, %arg2: memref<8x8x32xf32, #tpu.memory_space<vmem>>, %arg3: memref<8x8x32xf32, #tpu.memory_space<vmem>>, %arg4: memref<8x8x32xf32, #tpu.memory_space<vmem>>, %arg5: memref<8x8x8xi8, #tpu.memory_space<vmem>>, %arg6: memref<8x8x32xf32, #tpu.memory_space<vmem>>, %arg7: memref<8x8x8xf32, #tpu.memory_space<vmem>>) attributes {dimension_semantics = [#tpu.dimension_semantics<parallel>, #tpu.dimension_semantics<arbitrary>], iteration_bounds = array<i64: 1, 1>, scalar_prefetch = 0 : i64, scratch_operands = 0 : i64, tpu.core_type = #tpu.core_type<tc>, window_params = [{transform_indices = @transform_0, window_bounds = array<i64: 8, 8, 32>}, {transform_indices = @transform_1, window_bounds = array<i64: 8, 8, 32>}, {transform_indices = @transform_2, window_bounds = array<i64: 8, 8, 32>}, {transform_indices = @transform_3, window_bounds = array<i64: 8, 8, 8>}, {transform_indices = @transform_4, window_bounds = array<i64: 8, 8, 32>}, {transform_indices = @transform_5, window_bounds = array<i64: 8, 8, 8>}]} {
    %c0 = arith.constant 0 : index
    %c0_0 = arith.constant 0 : index
    %c0_1 = arith.constant 0 : index
    %0 = vector.load %arg2[%c0, %c0_0, %c0_1] : memref<8x8x32xf32, #tpu.memory_space<vmem>>, vector<8x8x32xf32>
    %cst = arith.constant 0.176776692 : f32
    %1 = vector.broadcast %cst : f32 to vector<8x8x32xf32>
    %2 = arith.mulf %0, %1 : vector<8x8x32xf32>
    %3 = arith.truncf %2 : vector<8x8x32xf32> to vector<8x8x32xbf16>
    %c0_2 = arith.constant 0 : index
    %c0_3 = arith.constant 0 : index
    %c0_4 = arith.constant 0 : index
    %4 = vector.load %arg3[%c0_2, %c0_3, %c0_4] : memref<8x8x32xf32, #tpu.memory_space<vmem>>, vector<8x8x32xf32>
    %5 = arith.truncf %4 : vector<8x8x32xf32> to vector<8x8x32xbf16>
    %c0_5 = arith.constant 0 : index
    %c0_6 = arith.constant 0 : index
    %c0_7 = arith.constant 0 : index
    %6 = vector.load %arg4[%c0_5, %c0_6, %c0_7] : memref<8x8x32xf32, #tpu.memory_space<vmem>>, vector<8x8x32xf32>
    %7 = arith.truncf %6 : vector<8x8x32xf32> to vector<8x8x32xbf16>
    "tpu.trace_start"() <{level = 10 : i32, message = "bqd,bkd->bqk"}> : () -> ()
    %cst_8 = arith.constant dense<0.000000e+00> : vector<8x8x8xf32>
    %8 = tpu.matmul %3, %5, %cst_8 {dimension_numbers = #tpu.dot_dimension_numbers<[2], [2], [1], [1], [0, 0, 0, 1, 1, 1], [0], [0]>} : vector<8x8x32xbf16>, vector<8x8x32xbf16>, vector<8x8x8xf32> -> vector<8x8x8xf32>
    "tpu.trace_stop"() : () -> ()
    %c0_9 = arith.constant 0 : index
    %c0_10 = arith.constant 0 : index
    %c0_11 = arith.constant 0 : index
    %9 = vector.load %arg5[%c0_9, %c0_10, %c0_11] : memref<8x8x8xi8, #tpu.memory_space<vmem>>, vector<8x8x8xi8>
    %c0_i8 = arith.constant 0 : i8
    %10 = vector.broadcast %c0_i8 : i8 to vector<8x8x8xi8>
    %11 = arith.cmpi ne, %9, %10 : vector<8x8x8xi8>
    %cst_12 = arith.constant -1.000000e+09 : f32
    %12 = vector.broadcast %cst_12 : f32 to vector<8x8x8xf32>
    %13 = arith.select %11, %12, %8 : vector<8x8x8xi1>, vector<8x8x8xf32>
    %cst_13 = arith.constant dense<0xFF800000> : vector<8x8xf32>
    %14 = vector.multi_reduction <maximumf>, %13, %cst_13 [2] : vector<8x8x8xf32> to vector<8x8xf32>
    %15 = vector.shape_cast %14 : vector<8x8xf32> to vector<8x8x1xf32>
    %16 = vector.broadcast %15 : vector<8x8x1xf32> to vector<8x8x8xf32>
    %17 = arith.subf %13, %16 : vector<8x8x8xf32>
    %18 = math.exp %17 : vector<8x8x8xf32>
    %cst_14 = arith.constant dense<0.000000e+00> : vector<8x8xf32>
    %19 = vector.multi_reduction <add>, %18, %cst_14 [2] : vector<8x8x8xf32> to vector<8x8xf32>
    %20 = vector.shape_cast %19 : vector<8x8xf32> to vector<8x8x1xf32>
    %21 = tpu.reciprocal %20 {approx = true} : vector<8x8x1xf32> -> vector<8x8x1xf32>
    %22 = vector.broadcast %21 : vector<8x8x1xf32> to vector<8x8x8xf32>
    %23 = arith.mulf %18, %22 : vector<8x8x8xf32>
    %c0_15 = arith.constant 0 : index
    %c0_16 = arith.constant 0 : index
    %c0_17 = arith.constant 0 : index
    %24 = vector.load %arg7[%c0_15, %c0_16, %c0_17] : memref<8x8x8xf32, #tpu.memory_space<vmem>>, vector<8x8x8xf32>
    tpu.vector_store %arg7[%c0_15, %c0_16, %c0_17], %23 {strides = array<i32>} : memref<8x8x8xf32, #tpu.memory_space<vmem>>, vector<8x8x8xf32>,
    %25 = arith.truncf %23 : vector<8x8x8xf32> to vector<8x8x8xbf16>
    "tpu.trace_start"() <{level = 10 : i32, message = "bqk,bkd->bqd"}> : () -> ()
    %cst_18 = arith.constant dense<0.000000e+00> : vector<8x8x32xf32>
    %26 = tpu.matmul %25, %7, %cst_18 {dimension_numbers = #tpu.dot_dimension_numbers<[2], [1], [1], [2], [0, 0, 0, 1, 1, 2], [0], [0]>} : vector<8x8x8xbf16>, vector<8x8x32xbf16>, vector<8x8x32xf32> -> vector<8x8x32xf32>
    "tpu.trace_stop"() : () -> ()
    %c0_19 = arith.constant 0 : index
    %c0_20 = arith.constant 0 : index
    %c0_21 = arith.constant 0 : index
    %27 = vector.load %arg6[%c0_19, %c0_20, %c0_21] : memref<8x8x32xf32, #tpu.memory_space<vmem>>, vector<8x8x32xf32>
    tpu.vector_store %arg6[%c0_19, %c0_20, %c0_21], %26 {strides = array<i32>} : memref<8x8x32xf32, #tpu.memory_space<vmem>>, vector<8x8x32xf32>,
    return
  }
  func.func @transform_0(%arg0: i32, %arg1: i32) -> (i32, i32, i32) {
    %c0_i32 = arith.constant 0 : i32
    %c0_i32_0 = arith.constant 0 : i32
    return %arg0, %arg1, %c0_i32 : i32, i32, i32
  }
  func.func @transform_1(%arg0: i32, %arg1: i32) -> (i32, i32, i32) {
    %c0_i32 = arith.constant 0 : i32
    %c0_i32_0 = arith.constant 0 : i32
    %c0_i32_1 = arith.constant 0 : i32
    return %arg0, %c0_i32, %c0_i32_0 : i32, i32, i32
  }
  func.func @transform_2(%arg0: i32, %arg1: i32) -> (i32, i32, i32) {
    %c0_i32 = arith.constant 0 : i32
    %c0_i32_0 = arith.constant 0 : i32
    %c0_i32_1 = arith.constant 0 : i32
    return %arg0, %c0_i32, %c0_i32_0 : i32, i32, i32
  }
  func.func @transform_3(%arg0: i32, %arg1: i32) -> (i32, i32, i32) {
    %c0_i32 = arith.constant 0 : i32
    %c0_i32_0 = arith.constant 0 : i32
    return %arg0, %arg1, %c0_i32 : i32, i32, i32
  }
  func.func @transform_4(%arg0: i32, %arg1: i32) -> (i32, i32, i32) {
    %c0_i32 = arith.constant 0 : i32
    %c0_i32_0 = arith.constant 0 : i32
    return %arg0, %arg1, %c0_i32 : i32, i32, i32
  }
  func.func @transform_5(%arg0: i32, %arg1: i32) -> (i32, i32, i32) {
    %c0_i32 = arith.constant 0 : i32
    %c0_i32_0 = arith.constant 0 : i32
    return %arg0, %arg1, %c0_i32 : i32, i32, i32
  }
}

</mosaic_0001>

<llo_original>
// kernel: tpu_custom_call.1
$region0: #{tpu_custom_call.1}
  #allocation0 [shape = 'u32[]', space=smem, size = 0x4, offset = 0x4, fixed_abs, tag = 'smem constant byte address 0x4 - core index']
  #allocation1 [shape = 'u32[144,128]{1,0:T(1,128)}', space=vmem, size = 0x12000, scoped, tag = 'internal scratch']
  %s0 = inlined_call_operand.hbm [shape: f32[8,8,32], index: 0, kind: input, shape index: {}]
  %s1 = inlined_call_operand.hbm [shape: f32[8,8,32], index: 1, kind: input, shape index: {}]
  %s2 = inlined_call_operand.hbm [shape: f32[8,8,32], index: 2, kind: input, shape index: {}]
  %s3 = inlined_call_operand.hbm [shape: s8[8,8,8], index: 3, kind: input, shape index: {}]
  %s4 = inlined_call_operand.hbm [shape: f32[8,8,32], index: 4, kind: output, shape index: {0}]
  %s5 = inlined_call_operand.hbm [shape: f32[8,8,8], index: 5, kind: output, shape index: {1}]
  %6 = xla_tuple %s4, %s5
  %s7 = sld [smem:[#allocation0]]
  $region50: #{tpu_custom_call.1} parent=0
    _
  %s9 = ssub.s32 1, %s7
  %s10 = scalar_select 0, %s9, %s7
  $region1: #{tpu_custom_call.1} parent=0
    #allocation2 [shape = 'u8[32768]{0}', space=vmem, size = 0x8000, scoped, tag = 'input window, operand 0, single buffered']
    #allocation3 [shape = 's32[1]{0}', space=sflag, size = 0x4, scoped, tag = 'scoped memory for tpu_custom_call.1']
    #allocation4 [shape = 's32[1]{0}', space=sflag, size = 0x4, scoped, tag = 'scoped memory for tpu_custom_call.1']
    #allocation5 [shape = 'u8[32768]{0}', space=vmem, size = 0x8000, scoped, tag = 'input window, operand 1, single buffered']
    #allocation6 [shape = 's32[1]{0}', space=sflag, size = 0x4, scoped, tag = 'scoped memory for tpu_custom_call.1']
    #allocation7 [shape = 'u8[32768]{0}', space=vmem, size = 0x8000, scoped, tag = 'input window, operand 2, single buffered']
    #allocation8 [shape = 'u8[8192]{0}', space=vmem, size = 0x2000, scoped, tag = 'input window, operand 3, single buffered']
    #allocation9 [shape = 's32[1]{0}', space=sflag, size = 0x4, scoped, tag = 'scoped memory for tpu_custom_call.1']
    #allocation10 [shape = 'u8[32768]{0}', space=vmem, size = 0x8000, scoped, tag = 'output window, operand 0, single buffered']
    #allocation11 [shape = 'u8[32768]{0}', space=vmem, size = 0x8000, scoped, tag = 'output window, operand 1, single buffered']
    #allocation12 [shape = 's32[1]{0}', space=sflag, size = 0x4, scoped, tag = 'scoped memory for tpu_custom_call.1']
    %11 = vsyncpa [#allocation3], 0
    %12 = vsyncpa [#allocation6], 0
    %13 = vsyncpa [#allocation9], 0
    %14 = vsyncpa [#allocation4], 0
    %15 = vsyncpa [#allocation12], 0
    // Predicated region
    $region2: #{tpu_custom_call.1} parent=1 // pred_check
      _
    $region3: #{tpu_custom_call.1} parent=1 // pred_check_branch
      %17 = sbr.rel (0) target = $region5
    $region4: #{tpu_custom_call.1} parent=1 // pred_region
      %s19 = ssub.s32 1024, 1024
      %20 = vsyncadd [#allocation3], %s19
      %s21 = sshll.u32 [#allocation2], 4
      %s22 = int_to_ptr.vmem [resolvable:$true] %s21
      %27 = dma.hbm_to_vmem [thread:$0]  %s0, 1024, %s22, [#allocation3], 128, 128, 8
    $region5: #{tpu_custom_call.1} parent=1 // pred_fallthru
      _
    // Predicated region
    $region6: #{tpu_custom_call.1} parent=1 // pred_check
      _
    $region7: #{tpu_custom_call.1} parent=1 // pred_check_branch
      %29 = sbr.rel (0) target = $region9
    $region8: #{tpu_custom_call.1} parent=1 // pred_region
      %s31 = ssub.s32 1024, 1024
      %32 = vsyncadd [#allocation6], %s31
      %s33 = sshll.u32 [#allocation5], 4
      %s34 = int_to_ptr.vmem [resolvable:$true] %s33
      %39 = dma.hbm_to_vmem [thread:$0]  %s1, 1024, %s34, [#allocation6], 128, 128, 8
    $region9: #{tpu_custom_call.1} parent=1 // pred_fallthru
      _
    // Predicated region
    $region10: #{tpu_custom_call.1} parent=1 // pred_check
      _
    $region11: #{tpu_custom_call.1} parent=1 // pred_check_branch
      %41 = sbr.rel (0) target = $region13
    $region12: #{tpu_custom_call.1} parent=1 // pred_region
      %s43 = ssub.s32 1024, 1024
      %44 = vsyncadd [#allocation6], %s43
      %s45 = sshll.u32 [#allocation7], 4
      %s46 = int_to_ptr.vmem [resolvable:$true] %s45
      %51 = dma.hbm_to_vmem [thread:$0]  %s2, 1024, %s46, [#allocation6], 128, 128, 8
    $region13: #{tpu_custom_call.1} parent=1 // pred_fallthru
      _
    // Predicated region
    $region14: #{tpu_custom_call.1} parent=1 // pred_check
      _
    $region15: #{tpu_custom_call.1} parent=1 // pred_check_branch
      %53 = sbr.rel (0) target = $region17
    $region16: #{tpu_custom_call.1} parent=1 // pred_region
      %s55 = ssub.s32 256, 256
      %56 = vsyncadd [#allocation9], %s55
      %s57 = sshll.u32 [#allocation8], 4
      %s58 = int_to_ptr.vmem [resolvable:$true] %s57
      %63 = dma.hbm_to_vmem [thread:$0]  %s3, 256, %s58, [#allocation9], 32, 32, 2
    $region17: #{tpu_custom_call.1} parent=1 // pred_fallthru
      _
    // Predicated region
    $region18: #{tpu_custom_call.1} parent=1 // pred_check
      _
    $region19: #{tpu_custom_call.1} parent=1 // pred_check_branch
      %65 = sbr.rel (0) target = $region21
    $region20: #{tpu_custom_call.1} parent=1 // pred_region
      %66 = dma.done [#allocation3], 1024
    $region21: #{tpu_custom_call.1} parent=1 // pred_fallthru
      _
    // Predicated region
    $region22: #{tpu_custom_call.1} parent=1 // pred_check
      _
    $region23: #{tpu_custom_call.1} parent=1 // pred_check_branch
      %68 = sbr.rel (0) target = $region25
    $region24: #{tpu_custom_call.1} parent=1 // pred_region
      %69 = dma.done [#allocation6], 1024
    $region25: #{tpu_custom_call.1} parent=1 // pred_fallthru
      _
    // Predicated region
    $region26: #{tpu_custom_call.1} parent=1 // pred_check
      _
    $region27: #{tpu_custom_call.1} parent=1 // pred_check_branch
      %71 = sbr.rel (0) target = $region29
    $region28: #{tpu_custom_call.1} parent=1 // pred_region
      %72 = dma.done [#allocation6], 1024
    $region29: #{tpu_custom_call.1} parent=1 // pred_fallthru
      _
    // Predicated region
    $region30: #{tpu_custom_call.1} parent=1 // pred_check
      _
    $region31: #{tpu_custom_call.1} parent=1 // pred_check_branch
      %74 = sbr.rel (0) target = $region33
    $region32: #{tpu_custom_call.1} parent=1 // pred_region
      %75 = dma.done [#allocation9], 256
    $region33: #{tpu_custom_call.1} parent=1 // pred_fallthru
      _
    %v79 = vld [vmem:[#allocation2] sm:$0xff]
    %v80 = vld [vmem:[#allocation2 + $0x8] sm:$0xff]
    %v81 = vld [vmem:[#allocation2 + $0x10] sm:$0xff]
    %v82 = vld [vmem:[#allocation2 + $0x18] sm:$0xff]
    %v83 = vld [vmem:[#allocation2 + $0x20] sm:$0xff]
    %v84 = vld [vmem:[#allocation2 + $0x28] sm:$0xff]
    %v85 = vld [vmem:[#allocation2 + $0x30] sm:$0xff]
    %v86 = vld [vmem:[#allocation2 + $0x38] sm:$0xff]
    %v87 = vmul.f32 %v79, 0.17677669
    %v88 = vmul.f32 %v80, 0.17677669
    %v89 = vmul.f32 %v81, 0.17677669
    %v90 = vmul.f32 %v82, 0.17677669
    %v91 = vmul.f32 %v83, 0.17677669
    %v92 = vmul.f32 %v84, 0.17677669
    %v93 = vmul.f32 %v85, 0.17677669
    %v94 = vmul.f32 %v86, 0.17677669
    %v95 = vpack.c.bf16 %v87, %v87
    %v96 = vpack.c.bf16 %v88, %v88
    %v97 = vpack.c.bf16 %v89, %v89
    %v98 = vpack.c.bf16 %v90, %v90
    %v99 = vpack.c.bf16 %v91, %v91
    %v100 = vpack.c.bf16 %v92, %v92
    %v101 = vpack.c.bf16 %v93, %v93
    %v102 = vpack.c.bf16 %v94, %v94
    %v103 = vld [vmem:[#allocation5] sm:$0xff]
    %v104 = vld [vmem:[#allocation5 + $0x8] sm:$0xff]
    %v105 = vld [vmem:[#allocation5 + $0x10] sm:$0xff]
    %v106 = vld [vmem:[#allocation5 + $0x18] sm:$0xff]
    %v107 = vld [vmem:[#allocation5 + $0x20] sm:$0xff]
    %v108 = vld [vmem:[#allocation5 + $0x28] sm:$0xff]
    %v109 = vld [vmem:[#allocation5 + $0x30] sm:$0xff]
    %v110 = vld [vmem:[#allocation5 + $0x38] sm:$0xff]
    %v111 = vpack.c.bf16 %v103, %v103
    %v112 = vpack.c.bf16 %v104, %v104
    %v113 = vpack.c.bf16 %v105, %v105
    %v114 = vpack.c.bf16 %v106, %v106
    %v115 = vpack.c.bf16 %v107, %v107
    %v116 = vpack.c.bf16 %v108, %v108
    %v117 = vpack.c.bf16 %v109, %v109
    %v118 = vpack.c.bf16 %v110, %v110
    %v119 = vld [vmem:[#allocation7] sm:$0xff]
    %v120 = vld [vmem:[#allocation7 + $0x8] sm:$0xff]
    %v121 = vld [vmem:[#allocation7 + $0x10] sm:$0xff]
    %v122 = vld [vmem:[#allocation7 + $0x18] sm:$0xff]
    %v123 = vld [vmem:[#allocation7 + $0x20] sm:$0xff]
    %v124 = vld [vmem:[#allocation7 + $0x28] sm:$0xff]
    %v125 = vld [vmem:[#allocation7 + $0x30] sm:$0xff]
    %v126 = vld [vmem:[#allocation7 + $0x38] sm:$0xff]
    %v127 = vpack.c.bf16 %v119, %v119
    %v128 = vpack.c.bf16 %v120, %v120
    %v129 = vpack.c.bf16 %v121, %v121
    %v130 = vpack.c.bf16 %v122, %v122
    %v131 = vpack.c.bf16 %v123, %v123
    %v132 = vpack.c.bf16 %v124, %v124
    %v133 = vpack.c.bf16 %v125, %v125
    %v134 = vpack.c.bf16 %v126, %v126
    %vm135 = vcmask 261120
    %v137 = vsel %vm135, %v95, 0
    %v140 = vsel %vm135, %v111, 0
    %142 = vmatprep.subr.bf16.mxu0 0
    %143 = vmatpush1.bf16.xpose.msra.mxu0 %v140
    %144 = vmatprep.subr.bf16.mxu0 0
    %145 = vmatpush1.bf16.xpose.msra.mxu0 0
    %146 = vmatprep.subr.bf16.mxu0 0
    %147 = vmatpush1.bf16.xpose.msra.mxu0 0
    %148 = vmatprep.subr.bf16.mxu0 0
    %149 = vmatpush1.bf16.xpose.msra.mxu0 0
    %150 = vmatprep.subr.bf16.mxu0 0
    %151 = vmatpush1.bf16.xpose.msra.mxu0 0
    %152 = vmatprep.subr.bf16.mxu0 0
    %153 = vmatpush1.bf16.xpose.msra.mxu0 0
    %154 = vmatprep.subr.bf16.mxu0 0
    %155 = vmatpush1.bf16.xpose.msra.mxu0 0
    %156 = vmatprep.subr.bf16.mxu0 0
    %157 = vmatpush1.bf16.xpose.msra.mxu0 0
    %158 = vmatprep.subr.bf16.mxu0 0
    %159 = vmatpush1.bf16.xpose.msra.mxu0 0
    %160 = vmatprep.subr.bf16.mxu0 0
    %161 = vmatpush1.bf16.xpose.msra.mxu0 0
    %162 = vmatprep.subr.bf16.mxu0 0
    %163 = vmatpush1.bf16.xpose.msra.mxu0 0
    %164 = vmatprep.subr.bf16.mxu0 0
    %165 = vmatpush1.bf16.xpose.msra.mxu0 0
    %166 = vmatprep.subr.bf16.mxu0 0
    %167 = vmatpush1.bf16.xpose.msra.mxu0 0
    %168 = vmatprep.subr.bf16.mxu0 0
    %169 = vmatpush1.bf16.xpose.msra.mxu0 0
    %170 = vmatprep.subr.bf16.mxu0 0
    %171 = vmatpush1.bf16.xpose.msra.mxu0 0
    %172 = vmatprep.subr.bf16.mxu0 0
    %173 = vmatpush1.bf16.xpose.msra.mxu0 0
    %174 = vmatprep.mubr.bf16.mxu0 0
    %175 = vmatmul.mubr.bf16.gmra.mrb[0].mxu0 %v137
    %v176 = vpop.f32.mrb[0].mxu0
    %v177 = vadd.f32 0.0, %v176
    %v178 = vpop.f32.mrb[0].mxu0
    %v179 = vpop.f32.mrb[0].mxu0
    %v180 = vpop.f32.mrb[0].mxu0
    %181 = vdwg.mxu0
    %v183 = vsel %vm135, %v96, 0
    %v186 = vsel %vm135, %v112, 0
    %188 = vmatprep.subr.bf16.mxu0 0
    %189 = vmatpush1.bf16.xpose.msra.mxu0 %v186
    %190 = vmatprep.subr.bf16.mxu0 0
    %191 = vmatpush1.bf16.xpose.msra.mxu0 0
    %192 = vmatprep.subr.bf16.mxu0 0
    %193 = vmatpush1.bf16.xpose.msra.mxu0 0
    %194 = vmatprep.subr.bf16.mxu0 0
    %195 = vmatpush1.bf16.xpose.msra.mxu0 0
    %196 = vmatprep.subr.bf16.mxu0 0
    %197 = vmatpush1.bf16.xpose.msra.mxu0 0
    %198 = vmatprep.subr.bf16.mxu0 0
    %199 = vmatpush1.bf16.xpose.msra.mxu0 0
    %200 = vmatprep.subr.bf16.mxu0 0
    %201 = vmatpush1.bf16.xpose.msra.mxu0 0
    %202 = vmatprep.subr.bf16.mxu0 0
    %203 = vmatpush1.bf16.xpose.msra.mxu0 0
    %204 = vmatprep.subr.bf16.mxu0 0
    %205 = vmatpush1.bf16.xpose.msra.mxu0 0
    %206 = vmatprep.subr.bf16.mxu0 0
    %207 = vmatpush1.bf16.xpose.msra.mxu0 0
    %208 = vmatprep.subr.bf16.mxu0 0
    %209 = vmatpush1.bf16.xpose.msra.mxu0 0
    %210 = vmatprep.subr.bf16.mxu0 0
    %211 = vmatpush1.bf16.xpose.msra.mxu0 0
    %212 = vmatprep.subr.bf16.mxu0 0
    %213 = vmatpush1.bf16.xpose.msra.mxu0 0
    %214 = vmatprep.subr.bf16.mxu0 0
    %215 = vmatpush1.bf16.xpose.msra.mxu0 0
    %216 = vmatprep.subr.bf16.mxu0 0
    %217 = vmatpush1.bf16.xpose.msra.mxu0 0
    %218 = vmatprep.subr.bf16.mxu0 0
    %219 = vmatpush1.bf16.xpose.msra.mxu0 0
    %220 = vmatprep.mubr.bf16.mxu0 0
    %221 = vmatmul.mubr.bf16.gmra.mrb[0].mxu0 %v183
    %v222 = vpop.f32.mrb[0].mxu0
    %v223 = vadd.f32 0.0, %v222
    %v224 = vpop.f32.mrb[0].mxu0
    %v225 = vpop.f32.mrb[0].mxu0
    %v226 = vpop.f32.mrb[0].mxu0
    %227 = vdwg.mxu0
    %v229 = vsel %vm135, %v97, 0
    %v232 = vsel %vm135, %v113, 0
    %234 = vmatprep.subr.bf16.mxu0 0
    %235 = vmatpush1.bf16.xpose.msra.mxu0 %v232
    %236 = vmatprep.subr.bf16.mxu0 0
    %237 = vmatpush1.bf16.xpose.msra.mxu0 0
    %238 = vmatprep.subr.bf16.mxu0 0
    %239 = vmatpush1.bf16.xpose.msra.mxu0 0
    %240 = vmatprep.subr.bf16.mxu0 0
    %241 = vmatpush1.bf16.xpose.msra.mxu0 0
    %242 = vmatprep.subr.bf16.mxu0 0
    %243 = vmatpush1.bf16.xpose.msra.mxu0 0
    %244 = vmatprep.subr.bf16.mxu0 0
    %245 = vmatpush1.bf16.xpose.msra.mxu0 0
    %246 = vmatprep.subr.bf16.mxu0 0
    %247 = vmatpush1.bf16.xpose.msra.mxu0 0
    %248 = vmatprep.subr.bf16.mxu0 0
    %249 = vmatpush1.bf16.xpose.msra.mxu0 0
    %250 = vmatprep.subr.bf16.mxu0 0
    %251 = vmatpush1.bf16.xpose.msra.mxu0 0
    %252 = vmatprep.subr.bf16.mxu0 0
    %253 = vmatpush1.bf16.xpose.msra.mxu0 0
    %254 = vmatprep.subr.bf16.mxu0 0
    %255 = vmatpush1.bf16.xpose.msra.mxu0 0
    %256 = vmatprep.subr.bf16.mxu0 0
    %257 = vmatpush1.bf16.xpose.msra.mxu0 0
    %258 = vmatprep.subr.bf16.mxu0 0
    %259 = vmatpush1.bf16.xpose.msra.mxu0 0
    %260 = vmatprep.subr.bf16.mxu0 0
    %261 = vmatpush1.bf16.xpose.msra.mxu0 0
    %262 = vmatprep.subr.bf16.mxu0 0
    %263 = vmatpush1.bf16.xpose.msra.mxu0 0
    %264 = vmatprep.subr.bf16.mxu0 0
    %265 = vmatpush1.bf16.xpose.msra.mxu0 0
    %266 = vmatprep.mubr.bf16.mxu0 0
    %267 = vmatmul.mubr.bf16.gmra.mrb[0].mxu0 %v229
    %v268 = vpop.f32.mrb[0].mxu0
    %v269 = vadd.f32 0.0, %v268
    %v270 = vpop.f32.mrb[0].mxu0
    %v271 = vpop.f32.mrb[0].mxu0
    %v272 = vpop.f32.mrb[0].mxu0
    %273 = vdwg.mxu0
    %v275 = vsel %vm135, %v98, 0
    %v278 = vsel %vm135, %v114, 0
    %280 = vmatprep.subr.bf16.mxu0 0
    %281 = vmatpush1.bf16.xpose.msra.mxu0 %v278
    %282 = vmatprep.subr.bf16.mxu0 0
    %283 = vmatpush1.bf16.xpose.msra.mxu0 0
    %284 = vmatprep.subr.bf16.mxu0 0
    %285 = vmatpush1.bf16.xpose.msra.mxu0 0
    %286 = vmatprep.subr.bf16.mxu0 0
    %287 = vmatpush1.bf16.xpose.msra.mxu0 0
    %288 = vmatprep.subr.bf16.mxu0 0
    %289 = vmatpush1.bf16.xpose.msra.mxu0 0
    %290 = vmatprep.subr.bf16.mxu0 0
    %291 = vmatpush1.bf16.xpose.msra.mxu0 0
    %292 = vmatprep.subr.bf16.mxu0 0
    %293 = vmatpush1.bf16.xpose.msra.mxu0 0
    %294 = vmatprep.subr.bf16.mxu0 0
    %295 = vmatpush1.bf16.xpose.msra.mxu0 0
    %296 = vmatprep.subr.bf16.mxu0 0
    %297 = vmatpush1.bf16.xpose.msra.mxu0 0
    %298 = vmatprep.subr.bf16.mxu0 0
    %299 = vmatpush1.bf16.xpose.msra.mxu0 0
    %300 = vmatprep.subr.bf16.mxu0 0
    %301 = vmatpush1.bf16.xpose.msra.mxu0 0
    %302 = vmatprep.subr.bf16.mxu0 0
    %303 = vmatpush1.bf16.xpose.msra.mxu0 0
    %304 = vmatprep.subr.bf16.mxu0 0
    %305 = vmatpush1.bf16.xpose.msra.mxu0 0
    %306 = vmatprep.subr.bf16.mxu0 0
    %307 = vmatpush1.bf16.xpose.msra.mxu0 0
    %308 = vmatprep.subr.bf16.mxu0 0
    %309 = vmatpush1.bf16.xpose.msra.mxu0 0
    %310 = vmatprep.subr.bf16.mxu0 0
    %311 = vmatpush1.bf16.xpose.msra.mxu0 0
    %312 = vmatprep.mubr.bf16.mxu0 0
    %313 = vmatmul.mubr.bf16.gmra.mrb[0].mxu0 %v275
    %v314 = vpop.f32.mrb[0].mxu0
    %v315 = vadd.f32 0.0, %v314
    %v316 = vpop.f32.mrb[0].mxu0
    %v317 = vpop.f32.mrb[0].mxu0
    %v318 = vpop.f32.mrb[0].mxu0
    %319 = vdwg.mxu0
    %v321 = vsel %vm135, %v99, 0
    %v324 = vsel %vm135, %v115, 0
    %326 = vmatprep.subr.bf16.mxu0 0
    %327 = vmatpush1.bf16.xpose.msra.mxu0 %v324
    %328 = vmatprep.subr.bf16.mxu0 0
    %329 = vmatpush1.bf16.xpose.msra.mxu0 0
    %330 = vmatprep.subr.bf16.mxu0 0
    %331 = vmatpush1.bf16.xpose.msra.mxu0 0
    %332 = vmatprep.subr.bf16.mxu0 0
    %333 = vmatpush1.bf16.xpose.msra.mxu0 0
    %334 = vmatprep.subr.bf16.mxu0 0
    %335 = vmatpush1.bf16.xpose.msra.mxu0 0
    %336 = vmatprep.subr.bf16.mxu0 0
    %337 = vmatpush1.bf16.xpose.msra.mxu0 0
    %338 = vmatprep.subr.bf16.mxu0 0
    %339 = vmatpush1.bf16.xpose.msra.mxu0 0
    %340 = vmatprep.subr.bf16.mxu0 0
    %341 = vmatpush1.bf16.xpose.msra.mxu0 0
    %342 = vmatprep.subr.bf16.mxu0 0
    %343 = vmatpush1.bf16.xpose.msra.mxu0 0
    %344 = vmatprep.subr.bf16.mxu0 0
    %345 = vmatpush1.bf16.xpose.msra.mxu0 0
    %346 = vmatprep.subr.bf16.mxu0 0
    %347 = vmatpush1.bf16.xpose.msra.mxu0 0
    %348 = vmatprep.subr.bf16.mxu0 0
    %349 = vmatpush1.bf16.xpose.msra.mxu0 0
    %350 = vmatprep.subr.bf16.mxu0 0
    %351 = vmatpush1.bf16.xpose.msra.mxu0 0
    %352 = vmatprep.subr.bf16.mxu0 0
    %353 = vmatpush1.bf16.xpose.msra.mxu0 0
    %354 = vmatprep.subr.bf16.mxu0 0
    %355 = vmatpush1.bf16.xpose.msra.mxu0 0
    %356 = vmatprep.subr.bf16.mxu0 0
    %357 = vmatpush1.bf16.xpose.msra.mxu0 0
    %358 = vmatprep.mubr.bf16.mxu0 0
    %359 = vmatmul.mubr.bf16.gmra.mrb[0].mxu0 %v321
    %v360 = vpop.f32.mrb[0].mxu0
    %v361 = vadd.f32 0.0, %v360
    %v362 = vpop.f32.mrb[0].mxu0
    %v363 = vpop.f32.mrb[0].mxu0
    %v364 = vpop.f32.mrb[0].mxu0
    %365 = vdwg.mxu0
    %v367 = vsel %vm135, %v100, 0
    %v370 = vsel %vm135, %v116, 0
    %372 = vmatprep.subr.bf16.mxu0 0
    %373 = vmatpush1.bf16.xpose.msra.mxu0 %v370
    %374 = vmatprep.subr.bf16.mxu0 0
    %375 = vmatpush1.bf16.xpose.msra.mxu0 0
    %376 = vmatprep.subr.bf16.mxu0 0
    %377 = vmatpush1.bf16.xpose.msra.mxu0 0
    %378 = vmatprep.subr.bf16.mxu0 0
    %379 = vmatpush1.bf16.xpose.msra.mxu0 0
    %380 = vmatprep.subr.bf16.mxu0 0
    %381 = vmatpush1.bf16.xpose.msra.mxu0 0
    %382 = vmatprep.subr.bf16.mxu0 0
    %383 = vmatpush1.bf16.xpose.msra.mxu0 0
    %384 = vmatprep.subr.bf16.mxu0 0
    %385 = vmatpush1.bf16.xpose.msra.mxu0 0
    %386 = vmatprep.subr.bf16.mxu0 0
    %387 = vmatpush1.bf16.xpose.msra.mxu0 0
    %388 = vmatprep.subr.bf16.mxu0 0
    %389 = vmatpush1.bf16.xpose.msra.mxu0 0
    %390 = vmatprep.subr.bf16.mxu0 0
    %391 = vmatpush1.bf16.xpose.msra.mxu0 0
    %392 = vmatprep.subr.bf16.mxu0 0
    %393 = vmatpush1.bf16.xpose.msra.mxu0 0
    %394 = vmatprep.subr.bf16.mxu0 0
    %395 = vmatpush1.bf16.xpose.msra.mxu0 0
    %396 = vmatprep.subr.bf16.mxu0 0
    %397 = vmatpush1.bf16.xpose.msra.mxu0 0
    %398 = vmatprep.subr.bf16.mxu0 0
    %399 = vmatpush1.bf16.xpose.msra.mxu0 0
    %400 = vmatprep.subr.bf16.mxu0 0
    %401 = vmatpush1.bf16.xpose.msra.mxu0 0
    %402 = vmatprep.subr.bf16.mxu0 0
    %403 = vmatpush1.bf16.xpose.msra.mxu0 0
    %404 = vmatprep.mubr.bf16.mxu0 0
    %405 = vmatmul.mubr.bf16.gmra.mrb[0].mxu0 %v367
    %v406 = vpop.f32.mrb[0].mxu0
    %v407 = vadd.f32 0.0, %v406
    %v408 = vpop.f32.mrb[0].mxu0
    %v409 = vpop.f32.mrb[0].mxu0
    %v410 = vpop.f32.mrb[0].mxu0
    %411 = vdwg.mxu0
    %v413 = vsel %vm135, %v101, 0
    %v416 = vsel %vm135, %v117, 0
    %418 = vmatprep.subr.bf16.mxu0 0
    %419 = vmatpush1.bf16.xpose.msra.mxu0 %v416
    %420 = vmatprep.subr.bf16.mxu0 0
    %421 = vmatpush1.bf16.xpose.msra.mxu0 0
    %422 = vmatprep.subr.bf16.mxu0 0
    %423 = vmatpush1.bf16.xpose.msra.mxu0 0
    %424 = vmatprep.subr.bf16.mxu0 0
    %425 = vmatpush1.bf16.xpose.msra.mxu0 0
    %426 = vmatprep.subr.bf16.mxu0 0
    %427 = vmatpush1.bf16.xpose.msra.mxu0 0
    %428 = vmatprep.subr.bf16.mxu0 0
    %429 = vmatpush1.bf16.xpose.msra.mxu0 0
    %430 = vmatprep.subr.bf16.mxu0 0
    %431 = vmatpush1.bf16.xpose.msra.mxu0 0
    %432 = vmatprep.subr.bf16.mxu0 0
    %433 = vmatpush1.bf16.xpose.msra.mxu0 0
    %434 = vmatprep.subr.bf16.mxu0 0
    %435 = vmatpush1.bf16.xpose.msra.mxu0 0
    %436 = vmatprep.subr.bf16.mxu0 0
    %437 = vmatpush1.bf16.xpose.msra.mxu0 0
    %438 = vmatprep.subr.bf16.mxu0 0
    %439 = vmatpush1.bf16.xpose.msra.mxu0 0
    %440 = vmatprep.subr.bf16.mxu0 0
    %441 = vmatpush1.bf16.xpose.msra.mxu0 0
    %442 = vmatprep.subr.bf16.mxu0 0
    %443 = vmatpush1.bf16.xpose.msra.mxu0 0
    %444 = vmatprep.subr.bf16.mxu0 0
    %445 = vmatpush1.bf16.xpose.msra.mxu0 0
    %446 = vmatprep.subr.bf16.mxu0 0
    %447 = vmatpush1.bf16.xpose.msra.mxu0 0
    %448 = vmatprep.subr.bf16.mxu0 0
    %449 = vmatpush1.bf16.xpose.msra.mxu0 0
    %450 = vmatprep.mubr.bf16.mxu0 0
    %451 = vmatmul.mubr.bf16.gmra.mrb[0].mxu0 %v413
    %v452 = vpop.f32.mrb[0].mxu0
    %v453 = vadd.f32 0.0, %v452
    %v454 = vpop.f32.mrb[0].mxu0
    %v455 = vpop.f32.mrb[0].mxu0
    %v456 = vpop.f32.mrb[0].mxu0
    %457 = vdwg.mxu0
    %v459 = vsel %vm135, %v102, 0
    %v462 = vsel %vm135, %v118, 0
    %464 = vmatprep.subr.bf16.mxu0 0
    %465 = vmatpush1.bf16.xpose.msra.mxu0 %v462
    %466 = vmatprep.subr.bf16.mxu0 0
    %467 = vmatpush1.bf16.xpose.msra.mxu0 0
    %468 = vmatprep.subr.bf16.mxu0 0
    %469 = vmatpush1.bf16.xpose.msra.mxu0 0
    %470 = vmatprep.subr.bf16.mxu0 0
    %471 = vmatpush1.bf16.xpose.msra.mxu0 0
    %472 = vmatprep.subr.bf16.mxu0 0
    %473 = vmatpush1.bf16.xpose.msra.mxu0 0
    %474 = vmatprep.subr.bf16.mxu0 0
    %475 = vmatpush1.bf16.xpose.msra.mxu0 0
    %476 = vmatprep.subr.bf16.mxu0 0
    %477 = vmatpush1.bf16.xpose.msra.mxu0 0
    %478 = vmatprep.subr.bf16.mxu0 0
    %479 = vmatpush1.bf16.xpose.msra.mxu0 0
    %480 = vmatprep.subr.bf16.mxu0 0
    %481 = vmatpush1.bf16.xpose.msra.mxu0 0
    %482 = vmatprep.subr.bf16.mxu0 0
    %483 = vmatpush1.bf16.xpose.msra.mxu0 0
    %484 = vmatprep.subr.bf16.mxu0 0
    %485 = vmatpush1.bf16.xpose.msra.mxu0 0
    %486 = vmatprep.subr.bf16.mxu0 0
    %487 = vmatpush1.bf16.xpose.msra.mxu0 0
    %488 = vmatprep.subr.bf16.mxu0 0
    %489 = vmatpush1.bf16.xpose.msra.mxu0 0
    %490 = vmatprep.subr.bf16.mxu0 0
    %491 = vmatpush1.bf16.xpose.msra.mxu0 0
    %492 = vmatprep.subr.bf16.mxu0 0
    %493 = vmatpush1.bf16.xpose.msra.mxu0 0
    %494 = vmatprep.subr.bf16.mxu0 0
    %495 = vmatpush1.bf16.xpose.msra.mxu0 0
    %496 = vmatprep.mubr.bf16.mxu0 0
    %497 = vmatmul.mubr.bf16.gmra.mrb[0].mxu0 %v459
    %v498 = vpop.f32.mrb[0].mxu0
    %v499 = vadd.f32 0.0, %v498
    %v500 = vpop.f32.mrb[0].mxu0
    %v501 = vpop.f32.mrb[0].mxu0
    %v502 = vpop.f32.mrb[0].mxu0
    %503 = vdwg.mxu0
    %v504 = vld [vmem:[#allocation8] sm:$0x3]
    %v505 = vld [vmem:[#allocation8 + $0x2] sm:$0x3]
    %v506 = vld [vmem:[#allocation8 + $0x4] sm:$0x3]
    %v507 = vld [vmem:[#allocation8 + $0x6] sm:$0x3]
    %v508 = vld [vmem:[#allocation8 + $0x8] sm:$0x3]
    %v509 = vld [vmem:[#allocation8 + $0xa] sm:$0x3]
    %v510 = vld [vmem:[#allocation8 + $0xc] sm:$0x3]
    %v511 = vld [vmem:[#allocation8 + $0xe] sm:$0x3]
    %vm512 = vnez %v504
    %vm513 = vnez %v505
    %vm514 = vnez %v506
    %vm515 = vnez %v507
    %vm516 = vnez %v508
    %vm517 = vnez %v509
    %vm518 = vnez %v510
    %vm519 = vnez %v511
    %v520 = vsel %vm512, 16843009, 0
    %v521 = vsel %vm513, 16843009, 0
    %v522 = vsel %vm514, 16843009, 0
    %v523 = vsel %vm515, 16843009, 0
    %v524 = vsel %vm516, 16843009, 0
    %v525 = vsel %vm517, 16843009, 0
    %v526 = vsel %vm518, 16843009, 0
    %v527 = vsel %vm519, 16843009, 0
    %v528 = vunpack.c.0.s8 %v520
    %v529 = vunpack.c.0.s8 %v521
    %v530 = vunpack.c.0.s8 %v522
    %v531 = vunpack.c.0.s8 %v523
    %v532 = vunpack.c.0.s8 %v524
    %v533 = vunpack.c.0.s8 %v525
    %v534 = vunpack.c.0.s8 %v526
    %v535 = vunpack.c.0.s8 %v527
    %vm536 = vcmp.ne.s32.totalorder %v528, 0
    %vm537 = vcmp.ne.s32.totalorder %v529, 0
    %vm538 = vcmp.ne.s32.totalorder %v530, 0
    %vm539 = vcmp.ne.s32.totalorder %v531, 0
    %vm540 = vcmp.ne.s32.totalorder %v532, 0
    %vm541 = vcmp.ne.s32.totalorder %v533, 0
    %vm542 = vcmp.ne.s32.totalorder %v534, 0
    %vm543 = vcmp.ne.s32.totalorder %v535, 0
    %v544 = vsel %vm536, -1e+09, %v177
    %v545 = vsel %vm537, -1e+09, %v223
    %v546 = vsel %vm538, -1e+09, %v269
    %v547 = vsel %vm539, -1e+09, %v315
    %v548 = vsel %vm540, -1e+09, %v361
    %v549 = vsel %vm541, -1e+09, %v407
    %v550 = vsel %vm542, -1e+09, %v453
    %v551 = vsel %vm543, -1e+09, %v499
    %vm552 = vcmask 64512
    %v553 = vsel %vm552, %v544, -inf
    %554 = vmax.xlane.f32.xlu0 %v553
    %v555 = vpop.xlane.xlu0 %554
    %v556 = vsel %vm552, %v545, -inf
    %557 = vmax.xlane.f32.xlu0 %v556
    %v558 = vpop.xlane.xlu0 %557
    %v559 = vsel %vm552, %v546, -inf
    %560 = vmax.xlane.f32.xlu0 %v559
    %v561 = vpop.xlane.xlu0 %560
    %v562 = vsel %vm552, %v547, -inf
    %563 = vmax.xlane.f32.xlu0 %v562
    %v564 = vpop.xlane.xlu0 %563
    %v565 = vsel %vm552, %v548, -inf
    %566 = vmax.xlane.f32.xlu0 %v565
    %v567 = vpop.xlane.xlu0 %566
    %v568 = vsel %vm552, %v549, -inf
    %569 = vmax.xlane.f32.xlu0 %v568
    %v570 = vpop.xlane.xlu0 %569
    %v571 = vsel %vm552, %v550, -inf
    %572 = vmax.xlane.f32.xlu0 %v571
    %v573 = vpop.xlane.xlu0 %572
    %v574 = vsel %vm552, %v551, -inf
    %575 = vmax.xlane.f32.xlu0 %v574
    %v576 = vpop.xlane.xlu0 %575
    %v577 = vsub.f32 %v544, %v555
    %v578 = vsub.f32 %v545, %v558
    %v579 = vsub.f32 %v546, %v561
    %v580 = vsub.f32 %v547, %v564
    %v581 = vsub.f32 %v548, %v567
    %v582 = vsub.f32 %v549, %v570
    %v583 = vsub.f32 %v550, %v573
    %v584 = vsub.f32 %v551, %v576
    %v585 = vmul.f32 %v577, 1.442695
    %v586 = vpow.pop %v585
    %v587 = vmul.f32 %v578, 1.442695
    %v588 = vpow.pop %v587
    %v589 = vmul.f32 %v579, 1.442695
    %v590 = vpow.pop %v589
    %v591 = vmul.f32 %v580, 1.442695
    %v592 = vpow.pop %v591
    %v593 = vmul.f32 %v581, 1.442695
    %v594 = vpow.pop %v593
    %v595 = vmul.f32 %v582, 1.442695
    %v596 = vpow.pop %v595
    %v597 = vmul.f32 %v583, 1.442695
    %v598 = vpow.pop %v597
    %v599 = vmul.f32 %v584, 1.442695
    %v600 = vpow.pop %v599
    %v601 = vsel %vm552, %v586, 0.0
    %602 = vadd.xlane.f32.xlu0 %v601
    %v603 = vpop.xlane.xlu0 %602
    %v604 = vsel %vm552, %v588, 0.0
    %605 = vadd.xlane.f32.xlu0 %v604
    %v606 = vpop.xlane.xlu0 %605
    %v607 = vsel %vm552, %v590, 0.0
    %608 = vadd.xlane.f32.xlu0 %v607
    %v609 = vpop.xlane.xlu0 %608
    %v610 = vsel %vm552, %v592, 0.0
    %611 = vadd.xlane.f32.xlu0 %v610
    %v612 = vpop.xlane.xlu0 %611
    %v613 = vsel %vm552, %v594, 0.0
    %614 = vadd.xlane.f32.xlu0 %v613
    %v615 = vpop.xlane.xlu0 %614
    %v616 = vsel %vm552, %v596, 0.0
    %617 = vadd.xlane.f32.xlu0 %v616
    %v618 = vpop.xlane.xlu0 %617
    %v619 = vsel %vm552, %v598, 0.0
    %620 = vadd.xlane.f32.xlu0 %v619
    %v621 = vpop.xlane.xlu0 %620
    %v622 = vsel %vm552, %v600, 0.0
    %623 = vadd.xlane.f32.xlu0 %v622
    %v624 = vpop.xlane.xlu0 %623
    %v625 = vrcp.pop %v603
    %v626 = vrcp.pop %v606
    %v627 = vrcp.pop %v609
    %v628 = vrcp.pop %v612
    %v629 = vrcp.pop %v615
    %v630 = vrcp.pop %v618
    %v631 = vrcp.pop %v621
    %v632 = vrcp.pop %v624
    %v633 = vmul.f32 %v586, %v625
    %v634 = vmul.f32 %v588, %v626
    %v635 = vmul.f32 %v590, %v627
    %v636 = vmul.f32 %v592, %v628
    %v637 = vmul.f32 %v594, %v629
    %v638 = vmul.f32 %v596, %v630
    %v639 = vmul.f32 %v598, %v631
    %v640 = vmul.f32 %v600, %v632
    %641 = vst.msk [vmem:[#allocation11] sm:$0xff] %vm552, %v633
    %642 = vst.msk [vmem:[#allocation11 + $0x8] sm:$0xff] %vm552, %v634
    %643 = vst.msk [vmem:[#allocation11 + $0x10] sm:$0xff] %vm552, %v635
    %644 = vst.msk [vmem:[#allocation11 + $0x18] sm:$0xff] %vm552, %v636
    %645 = vst.msk [vmem:[#allocation11 + $0x20] sm:$0xff] %vm552, %v637
    %646 = vst.msk [vmem:[#allocation11 + $0x28] sm:$0xff] %vm552, %v638
    %647 = vst.msk [vmem:[#allocation11 + $0x30] sm:$0xff] %vm552, %v639
    %648 = vst.msk [vmem:[#allocation11 + $0x38] sm:$0xff] %vm552, %v640
    %v649 = vpack.c.bf16 %v633, %v633
    %v650 = vpack.c.bf16 %v634, %v634
    %v651 = vpack.c.bf16 %v635, %v635
    %v652 = vpack.c.bf16 %v636, %v636
    %v653 = vpack.c.bf16 %v637, %v637
    %v654 = vpack.c.bf16 %v638, %v638
    %v655 = vpack.c.bf16 %v639, %v639
    %v656 = vpack.c.bf16 %v640, %v640
    %v658 = vsel %vm552, %v649, 0
    %vm660 = vcmask 1043456
    %v662 = vsel %vm660, %v127, 0
    %664 = vmatprep.subr.bf16.mxu0 0
    %665 = vmatpush1.bf16.msra.mxu0 %v662
    %666 = vmatprep.subr.bf16.mxu0 0
    %667 = vmatpush1.bf16.msra.mxu0 0
    %668 = vmatprep.subr.bf16.mxu0 0
    %669 = vmatpush1.bf16.msra.mxu0 0
    %670 = vmatprep.subr.bf16.mxu0 0
    %671 = vmatpush1.bf16.msra.mxu0 0
    %672 = vmatprep.subr.bf16.mxu0 0
    %673 = vmatpush1.bf16.msra.mxu0 0
    %674 = vmatprep.subr.bf16.mxu0 0
    %675 = vmatpush1.bf16.msra.mxu0 0
    %676 = vmatprep.subr.bf16.mxu0 0
    %677 = vmatpush1.bf16.msra.mxu0 0
    %678 = vmatprep.subr.bf16.mxu0 0
    %679 = vmatpush1.bf16.msra.mxu0 0
    %680 = vmatprep.subr.bf16.mxu0 0
    %681 = vmatpush1.bf16.msra.mxu0 0
    %682 = vmatprep.subr.bf16.mxu0 0
    %683 = vmatpush1.bf16.msra.mxu0 0
    %684 = vmatprep.subr.bf16.mxu0 0
    %685 = vmatpush1.bf16.msra.mxu0 0
    %686 = vmatprep.subr.bf16.mxu0 0
    %687 = vmatpush1.bf16.msra.mxu0 0
    %688 = vmatprep.subr.bf16.mxu0 0
    %689 = vmatpush1.bf16.msra.mxu0 0
    %690 = vmatprep.subr.bf16.mxu0 0
    %691 = vmatpush1.bf16.msra.mxu0 0
    %692 = vmatprep.subr.bf16.mxu0 0
    %693 = vmatpush1.bf16.msra.mxu0 0
    %694 = vmatprep.subr.bf16.mxu0 0
    %695 = vmatpush1.bf16.msra.mxu0 0
    %696 = vmatprep.mubr.bf16.mxu0 0
    %697 = vmatmul.mubr.bf16.gmra.mrb[0].mxu0 %v658
    %v698 = vpop.f32.mrb[0].mxu0
    %v699 = vadd.f32 0.0, %v698
    %v700 = vpop.f32.mrb[0].mxu0
    %v701 = vpop.f32.mrb[0].mxu0
    %v702 = vpop.f32.mrb[0].mxu0
    %703 = vdwg.mxu0
    %v705 = vsel %vm552, %v650, 0
    %v708 = vsel %vm660, %v128, 0
    %710 = vmatprep.subr.bf16.mxu0 0
    %711 = vmatpush1.bf16.msra.mxu0 %v708
    %712 = vmatprep.subr.bf16.mxu0 0
    %713 = vmatpush1.bf16.msra.mxu0 0
    %714 = vmatprep.subr.bf16.mxu0 0
    %715 = vmatpush1.bf16.msra.mxu0 0
    %716 = vmatprep.subr.bf16.mxu0 0
    %717 = vmatpush1.bf16.msra.mxu0 0
    %718 = vmatprep.subr.bf16.mxu0 0
    %719 = vmatpush1.bf16.msra.mxu0 0
    %720 = vmatprep.subr.bf16.mxu0 0
    %721 = vmatpush1.bf16.msra.mxu0 0
    %722 = vmatprep.subr.bf16.mxu0 0
    %723 = vmatpush1.bf16.msra.mxu0 0
    %724 = vmatprep.subr.bf16.mxu0 0
    %725 = vmatpush1.bf16.msra.mxu0 0
    %726 = vmatprep.subr.bf16.mxu0 0
    %727 = vmatpush1.bf16.msra.mxu0 0
    %728 = vmatprep.subr.bf16.mxu0 0
    %729 = vmatpush1.bf16.msra.mxu0 0
    %730 = vmatprep.subr.bf16.mxu0 0
    %731 = vmatpush1.bf16.msra.mxu0 0
    %732 = vmatprep.subr.bf16.mxu0 0
    %733 = vmatpush1.bf16.msra.mxu0 0
    %734 = vmatprep.subr.bf16.mxu0 0
    %735 = vmatpush1.bf16.msra.mxu0 0
    %736 = vmatprep.subr.bf16.mxu0 0
    %737 = vmatpush1.bf16.msra.mxu0 0
    %738 = vmatprep.subr.bf16.mxu0 0
    %739 = vmatpush1.bf16.msra.mxu0 0
    %740 = vmatprep.subr.bf16.mxu0 0
    %741 = vmatpush1.bf16.msra.mxu0 0
    %742 = vmatprep.mubr.bf16.mxu0 0
    %743 = vmatmul.mubr.bf16.gmra.mrb[0].mxu0 %v705
    %v744 = vpop.f32.mrb[0].mxu0
    %v745 = vadd.f32 0.0, %v744
    %v746 = vpop.f32.mrb[0].mxu0
    %v747 = vpop.f32.mrb[0].mxu0
    %v748 = vpop.f32.mrb[0].mxu0
    %749 = vdwg.mxu0
    %v751 = vsel %vm552, %v651, 0
    %v754 = vsel %vm660, %v129, 0
    %756 = vmatprep.subr.bf16.mxu0 0
    %757 = vmatpush1.bf16.msra.mxu0 %v754
    %758 = vmatprep.subr.bf16.mxu0 0
    %759 = vmatpush1.bf16.msra.mxu0 0
    %760 = vmatprep.subr.bf16.mxu0 0
    %761 = vmatpush1.bf16.msra.mxu0 0
    %762 = vmatprep.subr.bf16.mxu0 0
    %763 = vmatpush1.bf16.msra.mxu0 0
    %764 = vmatprep.subr.bf16.mxu0 0
    %765 = vmatpush1.bf16.msra.mxu0 0
    %766 = vmatprep.subr.bf16.mxu0 0
    %767 = vmatpush1.bf16.msra.mxu0 0
    %768 = vmatprep.subr.bf16.mxu0 0
    %769 = vmatpush1.bf16.msra.mxu0 0
    %770 = vmatprep.subr.bf16.mxu0 0
    %771 = vmatpush1.bf16.msra.mxu0 0
    %772 = vmatprep.subr.bf16.mxu0 0
    %773 = vmatpush1.bf16.msra.mxu0 0
    %774 = vmatprep.subr.bf16.mxu0 0
    %775 = vmatpush1.bf16.msra.mxu0 0
    %776 = vmatprep.subr.bf16.mxu0 0
    %777 = vmatpush1.bf16.msra.mxu0 0
    %778 = vmatprep.subr.bf16.mxu0 0
    %779 = vmatpush1.bf16.msra.mxu0 0
    %780 = vmatprep.subr.bf16.mxu0 0
    %781 = vmatpush1.bf16.msra.mxu0 0
    %782 = vmatprep.subr.bf16.mxu0 0
    %783 = vmatpush1.bf16.msra.mxu0 0
    %784 = vmatprep.subr.bf16.mxu0 0
    %785 = vmatpush1.bf16.msra.mxu0 0
    %786 = vmatprep.subr.bf16.mxu0 0
    %787 = vmatpush1.bf16.msra.mxu0 0
    %788 = vmatprep.mubr.bf16.mxu0 0
    %789 = vmatmul.mubr.bf16.gmra.mrb[0].mxu0 %v751
    %v790 = vpop.f32.mrb[0].mxu0
    %v791 = vadd.f32 0.0, %v790
    %v792 = vpop.f32.mrb[0].mxu0
    %v793 = vpop.f32.mrb[0].mxu0
    %v794 = vpop.f32.mrb[0].mxu0
    %795 = vdwg.mxu0
    %v797 = vsel %vm552, %v652, 0
    %v800 = vsel %vm660, %v130, 0
    %802 = vmatprep.subr.bf16.mxu0 0
    %803 = vmatpush1.bf16.msra.mxu0 %v800
    %804 = vmatprep.subr.bf16.mxu0 0
    %805 = vmatpush1.bf16.msra.mxu0 0
    %806 = vmatprep.subr.bf16.mxu0 0
    %807 = vmatpush1.bf16.msra.mxu0 0
    %808 = vmatprep.subr.bf16.mxu0 0
    %809 = vmatpush1.bf16.msra.mxu0 0
    %810 = vmatprep.subr.bf16.mxu0 0
    %811 = vmatpush1.bf16.msra.mxu0 0
    %812 = vmatprep.subr.bf16.mxu0 0
    %813 = vmatpush1.bf16.msra.mxu0 0
    %814 = vmatprep.subr.bf16.mxu0 0
    %815 = vmatpush1.bf16.msra.mxu0 0
    %816 = vmatprep.subr.bf16.mxu0 0
    %817 = vmatpush1.bf16.msra.mxu0 0
    %818 = vmatprep.subr.bf16.mxu0 0
    %819 = vmatpush1.bf16.msra.mxu0 0
    %820 = vmatprep.subr.bf16.mxu0 0
    %821 = vmatpush1.bf16.msra.mxu0 0
    %822 = vmatprep.subr.bf16.mxu0 0
    %823 = vmatpush1.bf16.msra.mxu0 0
    %824 = vmatprep.subr.bf16.mxu0 0
    %825 = vmatpush1.bf16.msra.mxu0 0
    %826 = vmatprep.subr.bf16.mxu0 0
    %827 = vmatpush1.bf16.msra.mxu0 0
    %828 = vmatprep.subr.bf16.mxu0 0
    %829 = vmatpush1.bf16.msra.mxu0 0
    %830 = vmatprep.subr.bf16.mxu0 0
    %831 = vmatpush1.bf16.msra.mxu0 0
    %832 = vmatprep.subr.bf16.mxu0 0
    %833 = vmatpush1.bf16.msra.mxu0 0
    %834 = vmatprep.mubr.bf16.mxu0 0
    %835 = vmatmul.mubr.bf16.gmra.mrb[0].mxu0 %v797
    %v836 = vpop.f32.mrb[0].mxu0
    %v837 = vadd.f32 0.0, %v836
    %v838 = vpop.f32.mrb[0].mxu0
    %v839 = vpop.f32.mrb[0].mxu0
    %v840 = vpop.f32.mrb[0].mxu0
    %841 = vdwg.mxu0
    %v843 = vsel %vm552, %v653, 0
    %v846 = vsel %vm660, %v131, 0
    %848 = vmatprep.subr.bf16.mxu0 0
    %849 = vmatpush1.bf16.msra.mxu0 %v846
    %850 = vmatprep.subr.bf16.mxu0 0
    %851 = vmatpush1.bf16.msra.mxu0 0
    %852 = vmatprep.subr.bf16.mxu0 0
    %853 = vmatpush1.bf16.msra.mxu0 0
    %854 = vmatprep.subr.bf16.mxu0 0
    %855 = vmatpush1.bf16.msra.mxu0 0
    %856 = vmatprep.subr.bf16.mxu0 0
    %857 = vmatpush1.bf16.msra.mxu0 0
    %858 = vmatprep.subr.bf16.mxu0 0
    %859 = vmatpush1.bf16.msra.mxu0 0
    %860 = vmatprep.subr.bf16.mxu0 0
    %861 = vmatpush1.bf16.msra.mxu0 0
    %862 = vmatprep.subr.bf16.mxu0 0
    %863 = vmatpush1.bf16.msra.mxu0 0
    %864 = vmatprep.subr.bf16.mxu0 0
    %865 = vmatpush1.bf16.msra.mxu0 0
    %866 = vmatprep.subr.bf16.mxu0 0
    %867 = vmatpush1.bf16.msra.mxu0 0
    %868 = vmatprep.subr.bf16.mxu0 0
    %869 = vmatpush1.bf16.msra.mxu0 0
    %870 = vmatprep.subr.bf16.mxu0 0
    %871 = vmatpush1.bf16.msra.mxu0 0
    %872 = vmatprep.subr.bf16.mxu0 0
    %873 = vmatpush1.bf16.msra.mxu0 0
    %874 = vmatprep.subr.bf16.mxu0 0
    %875 = vmatpush1.bf16.msra.mxu0 0
    %876 = vmatprep.subr.bf16.mxu0 0
    %877 = vmatpush1.bf16.msra.mxu0 0
    %878 = vmatprep.subr.bf16.mxu0 0
    %879 = vmatpush1.bf16.msra.mxu0 0
    %880 = vmatprep.mubr.bf16.mxu0 0
    %881 = vmatmul.mubr.bf16.gmra.mrb[0].mxu0 %v843
    %v882 = vpop.f32.mrb[0].mxu0
    %v883 = vadd.f32 0.0, %v882
    %v884 = vpop.f32.mrb[0].mxu0
    %v885 = vpop.f32.mrb[0].mxu0
    %v886 = vpop.f32.mrb[0].mxu0
    %887 = vdwg.mxu0
    %v889 = vsel %vm552, %v654, 0
    %v892 = vsel %vm660, %v132, 0
    %894 = vmatprep.subr.bf16.mxu0 0
    %895 = vmatpush1.bf16.msra.mxu0 %v892
    %896 = vmatprep.subr.bf16.mxu0 0
    %897 = vmatpush1.bf16.msra.mxu0 0
    %898 = vmatprep.subr.bf16.mxu0 0
    %899 = vmatpush1.bf16.msra.mxu0 0
    %900 = vmatprep.subr.bf16.mxu0 0
    %901 = vmatpush1.bf16.msra.mxu0 0
    %902 = vmatprep.subr.bf16.mxu0 0
    %903 = vmatpush1.bf16.msra.mxu0 0
    %904 = vmatprep.subr.bf16.mxu0 0
    %905 = vmatpush1.bf16.msra.mxu0 0
    %906 = vmatprep.subr.bf16.mxu0 0
    %907 = vmatpush1.bf16.msra.mxu0 0
    %908 = vmatprep.subr.bf16.mxu0 0
    %909 = vmatpush1.bf16.msra.mxu0 0
    %910 = vmatprep.subr.bf16.mxu0 0
    %911 = vmatpush1.bf16.msra.mxu0 0
    %912 = vmatprep.subr.bf16.mxu0 0
    %913 = vmatpush1.bf16.msra.mxu0 0
    %914 = vmatprep.subr.bf16.mxu0 0
    %915 = vmatpush1.bf16.msra.mxu0 0
    %916 = vmatprep.subr.bf16.mxu0 0
    %917 = vmatpush1.bf16.msra.mxu0 0
    %918 = vmatprep.subr.bf16.mxu0 0
    %919 = vmatpush1.bf16.msra.mxu0 0
    %920 = vmatprep.subr.bf16.mxu0 0
    %921 = vmatpush1.bf16.msra.mxu0 0
    %922 = vmatprep.subr.bf16.mxu0 0
    %923 = vmatpush1.bf16.msra.mxu0 0
    %924 = vmatprep.subr.bf16.mxu0 0
    %925 = vmatpush1.bf16.msra.mxu0 0
    %926 = vmatprep.mubr.bf16.mxu0 0
    %927 = vmatmul.mubr.bf16.gmra.mrb[0].mxu0 %v889
    %v928 = vpop.f32.mrb[0].mxu0
    %v929 = vadd.f32 0.0, %v928
    %v930 = vpop.f32.mrb[0].mxu0
    %v931 = vpop.f32.mrb[0].mxu0
    %v932 = vpop.f32.mrb[0].mxu0
    %933 = vdwg.mxu0
    %v935 = vsel %vm552, %v655, 0
    %v938 = vsel %vm660, %v133, 0
    %940 = vmatprep.subr.bf16.mxu0 0
    %941 = vmatpush1.bf16.msra.mxu0 %v938
    %942 = vmatprep.subr.bf16.mxu0 0
    %943 = vmatpush1.bf16.msra.mxu0 0
    %944 = vmatprep.subr.bf16.mxu0 0
    %945 = vmatpush1.bf16.msra.mxu0 0
    %946 = vmatprep.subr.bf16.mxu0 0
    %947 = vmatpush1.bf16.msra.mxu0 0
    %948 = vmatprep.subr.bf16.mxu0 0
    %949 = vmatpush1.bf16.msra.mxu0 0
    %950 = vmatprep.subr.bf16.mxu0 0
    %951 = vmatpush1.bf16.msra.mxu0 0
    %952 = vmatprep.subr.bf16.mxu0 0
    %953 = vmatpush1.bf16.msra.mxu0 0
    %954 = vmatprep.subr.bf16.mxu0 0
    %955 = vmatpush1.bf16.msra.mxu0 0
    %956 = vmatprep.subr.bf16.mxu0 0
    %957 = vmatpush1.bf16.msra.mxu0 0
    %958 = vmatprep.subr.bf16.mxu0 0
    %959 = vmatpush1.bf16.msra.mxu0 0
    %960 = vmatprep.subr.bf16.mxu0 0
    %961 = vmatpush1.bf16.msra.mxu0 0
    %962 = vmatprep.subr.bf16.mxu0 0
    %963 = vmatpush1.bf16.msra.mxu0 0
    %964 = vmatprep.subr.bf16.mxu0 0
    %965 = vmatpush1.bf16.msra.mxu0 0
    %966 = vmatprep.subr.bf16.mxu0 0
    %967 = vmatpush1.bf16.msra.mxu0 0
    %968 = vmatprep.subr.bf16.mxu0 0
    %969 = vmatpush1.bf16.msra.mxu0 0
    %970 = vmatprep.subr.bf16.mxu0 0
    %971 = vmatpush1.bf16.msra.mxu0 0
    %972 = vmatprep.mubr.bf16.mxu0 0
    %973 = vmatmul.mubr.bf16.gmra.mrb[0].mxu0 %v935
    %v974 = vpop.f32.mrb[0].mxu0
    %v975 = vadd.f32 0.0, %v974
    %v976 = vpop.f32.mrb[0].mxu0
    %v977 = vpop.f32.mrb[0].mxu0
    %v978 = vpop.f32.mrb[0].mxu0
    %979 = vdwg.mxu0
    %v981 = vsel %vm552, %v656, 0
    %v984 = vsel %vm660, %v134, 0
    %986 = vmatprep.subr.bf16.mxu0 0
    %987 = vmatpush1.bf16.msra.mxu0 %v984
    %988 = vmatprep.subr.bf16.mxu0 0
    %989 = vmatpush1.bf16.msra.mxu0 0
    %990 = vmatprep.subr.bf16.mxu0 0
    %991 = vmatpush1.bf16.msra.mxu0 0
    %992 = vmatprep.subr.bf16.mxu0 0
    %993 = vmatpush1.bf16.msra.mxu0 0
    %994 = vmatprep.subr.bf16.mxu0 0
    %995 = vmatpush1.bf16.msra.mxu0 0
    %996 = vmatprep.subr.bf16.mxu0 0
    %997 = vmatpush1.bf16.msra.mxu0 0
    %998 = vmatprep.subr.bf16.mxu0 0
    %999 = vmatpush1.bf16.msra.mxu0 0
    %1000 = vmatprep.subr.bf16.mxu0 0
    %1001 = vmatpush1.bf16.msra.mxu0 0
    %1002 = vmatprep.subr.bf16.mxu0 0
    %1003 = vmatpush1.bf16.msra.mxu0 0
    %1004 = vmatprep.subr.bf16.mxu0 0
    %1005 = vmatpush1.bf16.msra.mxu0 0
    %1006 = vmatprep.subr.bf16.mxu0 0
    %1007 = vmatpush1.bf16.msra.mxu0 0
    %1008 = vmatprep.subr.bf16.mxu0 0
    %1009 = vmatpush1.bf16.msra.mxu0 0
    %1010 = vmatprep.subr.bf16.mxu0 0
    %1011 = vmatpush1.bf16.msra.mxu0 0
    %1012 = vmatprep.subr.bf16.mxu0 0
    %1013 = vmatpush1.bf16.msra.mxu0 0
    %1014 = vmatprep.subr.bf16.mxu0 0
    %1015 = vmatpush1.bf16.msra.mxu0 0
    %1016 = vmatprep.subr.bf16.mxu0 0
    %1017 = vmatpush1.bf16.msra.mxu0 0
    %1018 = vmatprep.mubr.bf16.mxu0 0
    %1019 = vmatmul.mubr.bf16.gmra.mrb[0].mxu0 %v981
    %v1020 = vpop.f32.mrb[0].mxu0
    %v1021 = vadd.f32 0.0, %v1020
    %v1022 = vpop.f32.mrb[0].mxu0
    %v1023 = vpop.f32.mrb[0].mxu0
    %v1024 = vpop.f32.mrb[0].mxu0
    %1025 = vdwg.mxu0
    %1026 = vst.msk [vmem:[#allocation10] sm:$0xff] %vm135, %v699
    %1027 = vst.msk [vmem:[#allocation10 + $0x8] sm:$0xff] %vm135, %v745
    %1028 = vst.msk [vmem:[#allocation10 + $0x10] sm:$0xff] %vm135, %v791
    %1029 = vst.msk [vmem:[#allocation10 + $0x18] sm:$0xff] %vm135, %v837
    %1030 = vst.msk [vmem:[#allocation10 + $0x20] sm:$0xff] %vm135, %v883
    %1031 = vst.msk [vmem:[#allocation10 + $0x28] sm:$0xff] %vm135, %v929
    %1032 = vst.msk [vmem:[#allocation10 + $0x30] sm:$0xff] %vm135, %v975
    %1033 = vst.msk [vmem:[#allocation10 + $0x38] sm:$0xff] %vm135, %v1021
    // Predicated region
    $region34: #{tpu_custom_call.1} parent=1 // pred_check
      _
    $region35: #{tpu_custom_call.1} parent=1 // pred_check_branch
      %1035 = sbr.rel (0) target = $region37
    $region36: #{tpu_custom_call.1} parent=1 // pred_region
      %s1037 = ssub.s32 1024, 1024
      %1038 = vsyncadd [#allocation4], %s1037
      %s1039 = sshll.u32 [#allocation10], 4
      %s1040 = int_to_ptr.vmem [resolvable:$true] %s1039
      %1045 = dma.vmem_to_hbm [thread:$0]  %s1040, 1024, %s4, [#allocation4], 128, 128, 8
    $region37: #{tpu_custom_call.1} parent=1 // pred_fallthru
      _
    // Predicated region
    $region38: #{tpu_custom_call.1} parent=1 // pred_check
      _
    $region39: #{tpu_custom_call.1} parent=1 // pred_check_branch
      %1047 = sbr.rel (0) target = $region41
    $region40: #{tpu_custom_call.1} parent=1 // pred_region
      %s1049 = ssub.s32 1024, 1024
      %1050 = vsyncadd [#allocation12], %s1049
      %s1051 = sshll.u32 [#allocation11], 4
      %s1052 = int_to_ptr.vmem [resolvable:$true] %s1051
      %1057 = dma.vmem_to_hbm [thread:$0]  %s1052, 1024, %s5, [#allocation12], 128, 128, 8
    $region41: #{tpu_custom_call.1} parent=1 // pred_fallthru
      _
    // Predicated region
    $region42: #{tpu_custom_call.1} parent=1 // pred_check
      _
    $region43: #{tpu_custom_call.1} parent=1 // pred_check_branch
      %1059 = sbr.rel (0) target = $region45
    $region44: #{tpu_custom_call.1} parent=1 // pred_region
      %1060 = dma.done [#allocation4], 1024
    $region45: #{tpu_custom_call.1} parent=1 // pred_fallthru
      _
    // Predicated region
    $region46: #{tpu_custom_call.1} parent=1 // pred_check
      _
    $region47: #{tpu_custom_call.1} parent=1 // pred_check_branch
      %1062 = sbr.rel (0) target = $region49
    $region48: #{tpu_custom_call.1} parent=1 // pred_region
      %1063 = dma.done [#allocation12], 1024
    $region49: #{tpu_custom_call.1} parent=1 // pred_fallthru
      _
    %1064 = vsyncpa [#allocation3], 1
    %1065 = vsyncpa [#allocation6], 1
    %1066 = vsyncpa [#allocation9], 1
    %1067 = vsyncpa [#allocation4], 1
    %1068 = vsyncpa [#allocation12], 1

</llo_original>
